<compile_context>
chip_gen: v6e
topology: v6e:2x2x1
jax: 0.10.0
libtpu: 0.0.40
codegen_flags: <defaults>
</compile_context>

<pallas_src>
import numpy as np
import jax
import jax.numpy as jnp
from jax.experimental import pallas as pl
from jax.experimental.pallas import tpu as pltpu


def _round_up(x, m):
    return ((x + m - 1) // m) * m


def _vmem_capacity_bytes():
    try:
        info = pltpu.get_tpu_info()
        cap = getattr(info, "vmem_capacity_bytes", None)
        if cap:
            return int(cap)
    except Exception:
        pass
    return 64 * 1024 * 1024  # conservative (v7x per-TensorCore)


# ----------------------------- Pallas kernel -----------------------------

def make_patch_embed_kernel(use_norm, e_true, eps=1e-5):
    """Row-tiled patch projection, optionally fused with LayerNorm over the embed dim.

    The embed dim may be zero-padded to a lane-dense width; LN statistics divide by the
    true embed dim `e_true` (padded lanes hold exact zeros, so sums are unaffected).
    """
    inv_e = 1.0 / float(e_true)

    def kernel(x_ref, w_ref, b_ref, *rest):
        if use_norm:
            g_ref, beta_ref, o_ref = rest
        else:
            (o_ref,) = rest
        # (TM, K) @ (K, E_pad) on the MXU, f32 accumulation; bias add on the VPU (f32).
        y = jnp.dot(x_ref[...], w_ref[...], preferred_element_type=jnp.float32)
        y = y + b_ref[...]
        if use_norm:
            # One-pass stats: sum and sum-of-squares, var = E[y^2] - mean^2.
            s1 = jnp.sum(y, axis=-1, keepdims=True)
            s2 = jnp.sum(y * y, axis=-1, keepdims=True)
            mean = s1 * inv_e
            var = s2 * inv_e - mean * mean
            y = (y - mean) * jax.lax.rsqrt(var + eps)          # rsqrt -> EUP slot
            y = y * g_ref[...] + beta_ref[...]
        o_ref[...] = y.astype(o_ref.dtype)

    return kernel


# ------------------------- one-time parameter prep -------------------------

def prepare_patch_embed_params(params, patch_size, use_norm=False,
                               compute_dtype=jnp.float32):
    """Hoisted out of the forward path: weight reshape/transpose, dtype cast, E padding."""
    E, C, ph, pw = params['w_proj'].shape
    assert (ph, pw) == tuple(patch_size)
    K = C * ph * pw
    E_pad = _round_up(E, 128)                                   # lane-dense output width

    w_t = params['w_proj'].reshape(E, K).T.astype(compute_dtype)  # (K, E)
    b = params['b_proj'].astype(jnp.float32)
    if E_pad != E:
        w_t = jnp.pad(w_t, ((0, 0), (0, E_pad - E)))            # zero cols -> y_pad == 0
        b = jnp.pad(b, (0, E_pad - E))

    prep = dict(w_t=w_t, b=b[None, :], E=E, E_pad=E_pad, K=K,
                patch_size=(ph, pw), compute_dtype=compute_dtype)
    if use_norm:
        g = params['gamma'].astype(jnp.float32)
        bt = params['beta'].astype(jnp.float32)
        if E_pad != E:
            g = jnp.pad(g, (0, E_pad - E))
            bt = jnp.pad(bt, (0, E_pad - E))
        prep['gamma'] = g[None, :]
        prep['beta'] = bt[None, :]
    return prep


# ------------------------------- forward ----------------------------------

def patch_embed_forward(x, prep, use_norm=False, tm=None, out_dtype=jnp.float32):
    """x: (B, C, H, W).  Returns (B, Ho*Wo, embed_dim) in out_dtype."""
    B, C, H, W = x.shape
    ph, pw = prep['patch_size']
    Ho, Wo = H // ph, W // pw
    E, E_pad, K = prep['E'], prep['E_pad'], prep['K']
    M = B * Ho * Wo
    cdt = prep['compute_dtype']

    # Patch extraction (layout plumbing). allow_input_fusion below lets XLA fuse this
    # producer into the pallas_call operand instead of a separate HBM pass when it can.
    # Row order = (b, i, j) == flatten(2).transpose(1,2) token order in PyTorch.
    xp = (x.reshape(B, C, Ho, ph, Wo, pw)
           .transpose(0, 2, 4, 1, 3, 5)
           .reshape(M, K)
           .astype(cdt))

    in_bytes = jnp.dtype(cdt).itemsize
    out_bytes = jnp.dtype(out_dtype).itemsize
    vmem_cap = _vmem_capacity_bytes()

    # ---- row tile size: big tiles on 128 MiB parts, 512 on v7x, and always >= 2 grid
    #      steps (so the "parallel" axis can be sharded across both v7x TensorCores). ----
    if tm is None:
        tm_default = 1024 if vmem_cap > 96 * 1024 * 1024 else 512
        tm = min(tm_default, max(8, _round_up(pl.cdiv(M, 2), 8)))
    tm = max(8, _round_up(tm, 8))

    grid = (pl.cdiv(M, tm),)        # ragged last block handled by Pallas; no pad copy

    # ---- VMEM budget: double-buffered row tiles + single-buffered resident operands ----
    vmem_need = (2 * tm * K * in_bytes            # input row tile (2 buffers)
                 + K * E_pad * in_bytes           # weight (single buffer)
                 + 3 * E_pad * 4                  # bias / gamma / beta (f32)
                 + 2 * tm * E_pad * out_bytes)    # output tile (2 buffers)
    vmem_limit = int(min(0.75 * vmem_cap,
                         max(vmem_need + 8 * 1024 * 1024, 32 * 1024 * 1024)))

    resident = dict(pipeline_mode=pl.Buffered(1))  # constant index_map -> 1 buffer
    in_specs = [
        pl.BlockSpec((tm, K), lambda i: (i, 0)),                       # row tile
        pl.BlockSpec((K, E_pad), lambda i: (0, 0), **resident),        # resident weight
        pl.BlockSpec((1, E_pad), lambda i: (0, 0), **resident),        # resident bias
    ]
    args = [xp, prep['w_t'], prep['b']]
    if use_norm:
        in_specs += [pl.BlockSpec((1, E_pad), lambda i: (0, 0), **resident),   # gamma
                     pl.BlockSpec((1, E_pad), lambda i: (0, 0), **resident)]   # beta
        args += [prep['gamma'], prep['beta']]

    out = pl.pallas_call(
        make_patch_embed_kernel(use_norm, E),
        out_shape=jax.ShapeDtypeStruct((M, E_pad), out_dtype),
        grid=grid,
        in_specs=in_specs,
        out_specs=pl.BlockSpec((tm, E_pad), lambda i: (i, 0)),  # lane-dense output tile
        compiler_params=pltpu.CompilerParams(
            dimension_semantics=("parallel",),                  # shard rows across TCs
            vmem_limit_bytes=vmem_limit,
            allow_input_fusion=[True] + [False] * (len(args) - 1),
        ),
    )(*args)

    if E_pad != E:
        out = out[:, :E]
    return out.reshape(B, Ho * Wo, E)


# -------------------------- pure-JAX reference -----------------------------

def reference_forward(x, params, patch_size, use_norm=False, eps=1e-5):
    y = jax.lax.conv_general_dilated(
        x, params['w_proj'],
        window_strides=patch_size, padding='VALID',
        dimension_numbers=('NCHW', 'OIHW', 'NCHW'),
        precision=jax.lax.Precision.HIGHEST)
    y = y + params['b_proj'][None, :, None, None]
    B, E, Ho, Wo = y.shape
    y = y.reshape(B, E, Ho * Wo).transpose(0, 2, 1)            # (B, N, E)
    if use_norm:
        mean = jnp.mean(y, axis=-1, keepdims=True)
        var = jnp.mean(jnp.square(y - mean), axis=-1, keepdims=True)
        y = (y - mean) / jnp.sqrt(var + eps)
        y = y * params['gamma'] + params['beta']
    return y


if __name__ == "__main__":
    # Small but representative PatchEmbed config: 3-channel 32x32 image, 4x4 patches,
    # embed_dim=96  ->  M = 2*8*8 = 128 tokens, K = 48, E = 96 (padded to 128 lanes).
    B, C, H, W = 2, 3, 32, 32
    patch_size = (4, 4)
    embed_dim = 96

    key = jax.random.PRNGKey(0)
    ks = jax.random.split(key, 5)
    params = {
        'w_proj': 0.1 * jax.random.normal(ks[0], (embed_dim, C, patch_size[0], patch_size[1]), jnp.float32),
        'b_proj': 0.1 * jax.random.normal(ks[1], (embed_dim,), jnp.float32),
        'gamma':  1.0 + 0.1 * jax.random.normal(ks[2], (embed_dim,), jnp.float32),
        'beta':   0.1 * jax.random.normal(ks[3], (embed_dim,), jnp.float32),
    }
    x = jax.random.normal(ks[4], (B, C, H, W), jnp.float32)
    N = (H // patch_size[0]) * (W // patch_size[1])

    # 1) norm_layer=None path, f32, tm=48 does NOT divide M=128 -> exercises ragged tiles.
    prep = prepare_patch_embed_params(params, patch_size, use_norm=False,
                                      compute_dtype=jnp.float32)
    out = jax.block_until_ready(patch_embed_forward(x, prep, use_norm=False, tm=48))
    assert out.shape == (B, N, embed_dim)
    ref = reference_forward(x, params, patch_size, use_norm=False)
    np.testing.assert_allclose(np.asarray(out), np.asarray(ref), rtol=2e-4, atol=2e-4)

    # 2) norm_layer=nn.LayerNorm path, f32, default tm heuristic (>= 2 grid steps).
    prep_n = prepare_patch_embed_params(params, patch_size, use_norm=True,
                                        compute_dtype=jnp.float32)
    out_n = jax.block_until_ready(patch_embed_forward(x, prep_n, use_norm=True))
    ref_n = reference_forward(x, params, patch_size, use_norm=True)
    np.testing.assert_allclose(np.asarray(out_n), np.asarray(ref_n), rtol=2e-4, atol=2e-4)

    # 3) bf16 compute path (activations + weight in bf16, f32 accumulation / LN stats).
    prep_b = prepare_patch_embed_params(params, patch_size, use_norm=True,
                                        compute_dtype=jnp.bfloat16)
    out_b = jax.block_until_ready(patch_embed_forward(x, prep_b, use_norm=True, tm=64))
    np.testing.assert_allclose(np.asarray(out_b), np.asarray(ref_n), rtol=1e-1, atol=1e-1)

    print("KERNEL_OK")
</pallas_src>

<mosaic_0001>
module attributes {stable_mosaic.version = 11 : i64} {
  func.func @kernel(%arg0: i32, %arg1: memref<48x48xf32, #tpu.memory_space<vmem>>, %arg2: memref<48x128xf32, #tpu.memory_space<vmem>>, %arg3: memref<1x128xf32, #tpu.memory_space<vmem>>, %arg4: memref<48x128xf32, #tpu.memory_space<vmem>>) attributes {dimension_semantics = [#tpu.dimension_semantics<parallel>], iteration_bounds = array<i64: 3>, scalar_prefetch = 0 : i64, scratch_operands = 0 : i64, tpu.core_type = #tpu.core_type<tc>, window_params = [{transform_indices = @transform_0, window_bounds = array<i64: 48, 48>}, {pipeline_mode = #tpu.pipeline_mode<synchronous>, transform_indices = @transform_1, window_bounds = array<i64: 48, 128>}, {pipeline_mode = #tpu.pipeline_mode<synchronous>, transform_indices = @transform_2, window_bounds = array<i64: 1, 128>}, {transform_indices = @transform_3, window_bounds = array<i64: 48, 128>}]} {
    %c0 = arith.constant 0 : index
    %c0_0 = arith.constant 0 : index
    %0 = vector.load %arg1[%c0, %c0_0] : memref<48x48xf32, #tpu.memory_space<vmem>>, vector<48x48xf32>
    %c0_1 = arith.constant 0 : index
    %c0_2 = arith.constant 0 : index
    %1 = vector.load %arg2[%c0_1, %c0_2] : memref<48x128xf32, #tpu.memory_space<vmem>>, vector<48x128xf32>
    %cst = arith.constant dense<0.000000e+00> : vector<48x128xf32>
    %2 = tpu.matmul %0, %1, %cst {dimension_numbers = #tpu.dot_dimension_numbers<[1], [0], [0], [1], [0, 0, 1, 1], [], []>} : vector<48x48xf32>, vector<48x128xf32>, vector<48x128xf32> -> vector<48x128xf32>
    %c0_3 = arith.constant 0 : index
    %c0_4 = arith.constant 0 : index
    %3 = vector.load %arg3[%c0_3, %c0_4] : memref<1x128xf32, #tpu.memory_space<vmem>>, vector<1x128xf32>
    %4 = vector.broadcast %3 : vector<1x128xf32> to vector<48x128xf32>
    %5 = arith.addf %2, %4 : vector<48x128xf32>
    %c0_5 = arith.constant 0 : index
    %c0_6 = arith.constant 0 : index
    %6 = vector.load %arg4[%c0_5, %c0_6] : memref<48x128xf32, #tpu.memory_space<vmem>>, vector<48x128xf32>
    tpu.vector_store %arg4[%c0_5, %c0_6], %5 {strides = array<i32>} : memref<48x128xf32, #tpu.memory_space<vmem>>, vector<48x128xf32>,
    return
  }
  func.func @transform_0(%arg0: i32) -> (i32, i32) {
    %c0_i32 = arith.constant 0 : i32
    %c0_i32_0 = arith.constant 0 : i32
    return %arg0, %c0_i32 : i32, i32
  }
  func.func @transform_1(%arg0: i32) -> (i32, i32) {
    %c0_i32 = arith.constant 0 : i32
    %c0_i32_0 = arith.constant 0 : i32
    %c0_i32_1 = arith.constant 0 : i32
    return %c0_i32, %c0_i32_0 : i32, i32
  }
  func.func @transform_2(%arg0: i32) -> (i32, i32) {
    %c0_i32 = arith.constant 0 : i32
    %c0_i32_0 = arith.constant 0 : i32
    %c0_i32_1 = arith.constant 0 : i32
    return %c0_i32, %c0_i32_0 : i32, i32
  }
  func.func @transform_3(%arg0: i32) -> (i32, i32) {
    %c0_i32 = arith.constant 0 : i32
    %c0_i32_0 = arith.constant 0 : i32
    return %arg0, %c0_i32 : i32, i32
  }
}

</mosaic_0001>

<llo_original>
// kernel: tpu_custom_call.1
$region0: #{tpu_custom_call.1}
  #allocation0 [shape = 'u32[]', space=smem, size = 0x4, offset = 0x4, fixed_abs, tag = 'smem constant byte address 0x4 - core index']
  #allocation1 [shape = 'u32[144,128]{1,0:T(1,128)}', space=vmem, size = 0x12000, scoped, tag = 'internal scratch']
  %s0 = inlined_call_operand.vmem [shape: f32[128,48], index: 0, kind: input, shape index: {}]
  %s1 = inlined_call_operand.vmem [shape: f32[48,128], index: 1, kind: input, shape index: {}]
  %s2 = inlined_call_operand.vmem [shape: f32[1,128], index: 2, kind: input, shape index: {}]
  %s3 = inlined_call_operand.hbm [shape: f32[128,128], index: 3, kind: output, shape index: {}]
  %s4 = sld [smem:[#allocation0]]
  $region45: #{tpu_custom_call.1} parent=0
    _
  %s6 = ssub.s32 1, %s4
  %s7 = scalar_select 0, %s6, %s4
  $region1: #{tpu_custom_call.1} parent=0
    #allocation2 [shape = 'u8[49152]{0}', space=vmem, size = 0xc000, scoped, tag = 'output window, operand 0']
    #allocation3 [shape = 's32[2]{0}', space=sflag, size = 0x8, scoped, tag = 'scoped memory for tpu_custom_call.1']
    %8 = vsyncpa [#allocation3], 0
    %s9 = scalar_lea.sflag [#allocation3], 1
    %10 = vsyncpa %s9, 0
    loop: start=0, step=1, limit=5
    $region2: #{tpu_custom_call.1} parent=1 // loop_pre_header
      _
    $region3: #{tpu_custom_call.1} parent=1 // loop_header
      %s12 = sphi 0, %s16
      %p13 = scmp.ge.s32.totalorder %s12, 5
      %s22 = sphi 0, %s24
      %s25 = sphi 0, %s22
      %s26 = sphi 0, %s25
      %s42 = sphi 0, %s26
      %s46 = sphi 0, %s46
      %s48 = sphi 0, %s46
      %s49 = sphi 0, %s48
      %s63 = sphi 0, %s49
      %s67 = sphi 0, %s67
      %s69 = sphi 0, %s67
      %s70 = sphi 0, %s69
      %s84 = sphi 0, %s70
      %s90 = sphi 0, %s92
      %s93 = sphi 0, %s90
      %s94 = sphi 0, %s93
      %s110 = sphi 0, %s94
    $region4: #{tpu_custom_call.1} parent=1 // loop_header_branch
      %15 = sbr.rel (%p13) target = $region8
    $region5: #{tpu_custom_call.1} parent=1 // loop_body
      %s17 = ssub.s32 %s12, 1
      %s18 = ssub.s32 %s12, 2
      %s19 = sadd.s32 %s12, 1
      %s20 = ssub.s32 %s12, %s19
      %p21 = scmp.eq.s32.totalorder %s20, 0
      %s23 = sadd.s32 %s22, 1
      %s24 = scalar_select %p21, %s22, %s23
      %p27 = pneg %p21
      %p28 = scmp.eq.s32.totalorder %s12, 2
      %p29 = por %p27, %p28
      %p30 = scmp.ne.s32.totalorder %s22, %s25
      %p31 = scmp.eq.s32.totalorder %s12, 0
      %p32 = por %p30, %p31
      %p33 = scmp.ne.s32.totalorder %s22, %s25
      %p34 = scmp.eq.s32.totalorder %s17, 2
      %p35 = por %p33, %p34
      %p36 = scmp.ne.s32.totalorder %s25, %s26
      %p37 = scmp.eq.s32.totalorder %s17, 0
      %p38 = por %p36, %p37
      %p39 = scmp.ne.s32.totalorder %s25, %s26
      %p40 = scmp.eq.s32.totalorder %s18, 2
      %p41 = por %p39, %p40
      %p43 = scmp.ne.s32.totalorder %s26, %s42
      %p44 = scmp.eq.s32.totalorder %s18, 0
      %p45 = por %p43, %p44
      %s47 = sadd.s32 %s46, 1
      %p50 = scmp.eq.s32.totalorder %s12, 2
      %p51 = scmp.ne.s32.totalorder %s46, %s48
      %p52 = scmp.eq.s32.totalorder %s12, 0
      %p53 = por %p51, %p52
      %p54 = scmp.ne.s32.totalorder %s46, %s48
      %p55 = scmp.eq.s32.totalorder %s17, 2
      %p56 = por %p54, %p55
      %p57 = scmp.ne.s32.totalorder %s48, %s49
      %p58 = scmp.eq.s32.totalorder %s17, 0
      %p59 = por %p57, %p58
      %p60 = scmp.ne.s32.totalorder %s48, %s49
      %p61 = scmp.eq.s32.totalorder %s18, 2
      %p62 = por %p60, %p61
      %p64 = scmp.ne.s32.totalorder %s49, %s63
      %p65 = scmp.eq.s32.totalorder %s18, 0
      %p66 = por %p64, %p65
      %s68 = sadd.s32 %s67, 1
      %p71 = scmp.eq.s32.totalorder %s12, 2
      %p72 = scmp.ne.s32.totalorder %s67, %s69
      %p73 = scmp.eq.s32.totalorder %s12, 0
      %p74 = por %p72, %p73
      %p75 = scmp.ne.s32.totalorder %s67, %s69
      %p76 = scmp.eq.s32.totalorder %s17, 2
      %p77 = por %p75, %p76
      %p78 = scmp.ne.s32.totalorder %s69, %s70
      %p79 = scmp.eq.s32.totalorder %s17, 0
      %p80 = por %p78, %p79
      %p81 = scmp.ne.s32.totalorder %s69, %s70
      %p82 = scmp.eq.s32.totalorder %s18, 2
      %p83 = por %p81, %p82
      %p85 = scmp.ne.s32.totalorder %s70, %s84
      %p86 = scmp.eq.s32.totalorder %s18, 0
      %p87 = por %p85, %p86
      %s88 = ssub.s32 %s12, %s19
      %p89 = scmp.eq.s32.totalorder %s88, 0
      %s91 = sadd.s32 %s90, 1
      %s92 = scalar_select %p89, %s90, %s91
      %p95 = pneg %p89
      %p96 = scmp.eq.s32.totalorder %s12, 2
      %p97 = por %p95, %p96
      %p98 = scmp.ne.s32.totalorder %s90, %s93
      %p99 = scmp.eq.s32.totalorder %s12, 0
      %p100 = por %p98, %p99
      %p101 = scmp.ne.s32.totalorder %s90, %s93
      %p102 = scmp.eq.s32.totalorder %s17, 2
      %p103 = por %p101, %p102
      %p104 = scmp.ne.s32.totalorder %s93, %s94
      %p105 = scmp.eq.s32.totalorder %s17, 0
      %p106 = por %p104, %p105
      %p107 = scmp.ne.s32.totalorder %s93, %s94
      %p108 = scmp.eq.s32.totalorder %s18, 2
      %p109 = por %p107, %p108
      %p111 = scmp.ne.s32.totalorder %s94, %s110
      %p112 = scmp.eq.s32.totalorder %s18, 0
      %p113 = por %p111, %p112
      %p114 = scmp.le.s32.totalorder 1, %s12
      %p115 = scmp.lt.s32.totalorder %s12, 4
      %p116 = pnand %p114, %p115
      %p117 = pneg %p116
      // Predicated region
      $region9: #{tpu_custom_call.1} parent=5 // pred_check
        _
      $region10: #{tpu_custom_call.1} parent=5 // pred_check_branch
        %119 = sbr.rel (%p116) target = $region12
      $region11: #{tpu_custom_call.1} parent=5 // pred_region
        %s120 = ssub.s32 %s12, 1
        // Predicated region
        $region13: #{tpu_custom_call.1} parent=11 // pred_check
          %p121 = pneg %p59
        $region14: #{tpu_custom_call.1} parent=11 // pred_check_branch
          %123 = sbr.rel (%p121) target = $region16
        $region15: #{tpu_custom_call.1} parent=11 // pred_region
          _
        $region16: #{tpu_custom_call.1} parent=11 // pred_fallthru
          _
        // Predicated region
        $region17: #{tpu_custom_call.1} parent=11 // pred_check
          %p124 = pneg %p80
        $region18: #{tpu_custom_call.1} parent=11 // pred_check_branch
          %126 = sbr.rel (%p124) target = $region20
        $region19: #{tpu_custom_call.1} parent=11 // pred_region
          _
        $region20: #{tpu_custom_call.1} parent=11 // pred_fallthru
          _
      $region12: #{tpu_custom_call.1} parent=5 // pred_fallthru
        _
      %p127 = scmp.lt.s32.totalorder %s12, 3
      // Predicated region
      $region21: #{tpu_custom_call.1} parent=5 // pred_check
        %p128 = pneg %p127
      $region22: #{tpu_custom_call.1} parent=5 // pred_check_branch
        %130 = sbr.rel (%p128) target = $region24
      $region23: #{tpu_custom_call.1} parent=5 // pred_region
        // Predicated region
        $region25: #{tpu_custom_call.1} parent=23 // pred_check
          %p131 = pneg %p32
        $region26: #{tpu_custom_call.1} parent=23 // pred_check_branch
          %133 = sbr.rel (%p131) target = $region28
        $region27: #{tpu_custom_call.1} parent=23 // pred_region
          %s134 = smul.u32 6, %s12
          %s135 = ssub.s32 16, %s134
          %p136 = scmp.lt.s32.totalorder %s135, 6
          %s137 = scalar_select %p136, %s135, 6
          %s138 = smul.u32 128, %s137
          %p139 = scmp.lt.s32.totalorder %s134, 15
          %s140 = scalar_select %p139, %s134, 15
          %s141 = smul.addr %s140, 8
          %s142 = scalar_lea.vmem %s0, %s141
          %s143 = smul.u32 6, %s12
          %s144 = ssub.s32 16, %s143
          %p145 = scmp.lt.s32.totalorder %s144, 6
          %s146 = scalar_select %p145, %s144, 6
          %s147 = smul.u32 128, %s146
        $region28: #{tpu_custom_call.1} parent=23 // pred_fallthru
          _
      $region24: #{tpu_custom_call.1} parent=5 // pred_fallthru
        _
      %p148 = scmp.le.s32.totalorder 1, %s12
      %p149 = scmp.lt.s32.totalorder %s12, 4
      %p150 = pnand %p148, %p149
      %p151 = pneg %p150
      // Predicated region
      $region29: #{tpu_custom_call.1} parent=5 // pred_check
        _
      $region30: #{tpu_custom_call.1} parent=5 // pred_check_branch
        %153 = sbr.rel (%p150) target = $region32
      $region31: #{tpu_custom_call.1} parent=5 // pred_region
        %s154 = ssub.s32 %s12, 1
        %s155 = smul.u32 6, %s17
        %s156 = ssub.s32 16, %s155
        %p157 = scmp.lt.s32.totalorder %s156, 6
        %s158 = scalar_select %p157, %s156, 6
        %s159 = smul.u32 128, %s158
        %p160 = scmp.lt.s32.totalorder %s155, 15
        %s161 = scalar_select %p160, %s155, 15
        %s162 = smul.addr %s161, 8
        %s163 = scalar_lea.vmem %s0, %s162
        %p164 = pneg %p38
        %p165 = pneg %p35
        %p166 = pneg %p59
        %p167 = pneg %p56
        %p168 = pneg %p80
        %p169 = pneg %p77
        %p170 = pneg %p106
        %p171 = pneg %p103
        %s172 = sand.u32 %s93, 1
        %s173 = scalar_lea.sflag [#allocation3], %s172
        %s174 = sand.u32 %s93, 1
        %s175 = smul.addr %s174, 48
        %s176 = scalar_lea.vmem [#allocation2], %s175
        %s177 = smul.u32 6, %s17
        %s178 = ssub.s32 16, %s177
        %p179 = scmp.lt.s32.totalorder %s178, 6
        %s180 = scalar_select %p179, %s178, 6
        %s181 = smul.u32 128, %s180
        %p182 = scmp.lt.s32.totalorder %s177, 15
        %s183 = scalar_select %p182, %s177, 15
        %s184 = smul.addr %s183, 8
        %s185 = scalar_lea.vmem %s0, %s184
        %s186 = smul.u32 6, %s17
        %s187 = ssub.s32 16, %s186
        %p188 = scmp.lt.s32.totalorder %s187, 6
        %s189 = scalar_select %p188, %s187, 6
        %s190 = smul.u32 128, %s189
        %s191 = smul.u32 6, %s17
        %s192 = ssub.s32 16, %s191
        %p193 = scmp.lt.s32.totalorder %s192, 6
        %s194 = scalar_select %p193, %s192, 6
        %s195 = smul.u32 128, %s194
        %v196 = vld [vmem:[%s185] sm:$0xff]
        %v197 = vld [vmem:[%s185 + $0x8] sm:$0xff]
        %v198 = vld [vmem:[%s185 + $0x10] sm:$0xff]
        %v199 = vld [vmem:[%s185 + $0x18] sm:$0xff]
        %v200 = vld [vmem:[%s185 + $0x20] sm:$0xff]
        %v201 = vld [vmem:[%s185 + $0x28] sm:$0xff]
        %v202 = vld [vmem:[%s1] sm:$0xff]
        %v203 = vld [vmem:[%s1 + $0x8] sm:$0xff]
        %v204 = vld [vmem:[%s1 + $0x10] sm:$0xff]
        %v205 = vld [vmem:[%s1 + $0x18] sm:$0xff]
        %v206 = vld [vmem:[%s1 + $0x20] sm:$0xff]
        %v207 = vld [vmem:[%s1 + $0x28] sm:$0xff]
        %v208 = vld [vmem:[%s2] sm:$0x1]
        %v210 = vlaneseq
        %v211 = vshrl.u32 %v210, 7
        %v212 = vsub.s32 0, %v211
        %v213 = vrot.slane %v208, %v212
        %vm215 = vcmask 392192
        %v217 = vsel %vm215, %v196, 0
        %v220 = vsel %vm215, %v197, 0
        %v223 = vsel %vm215, %v198, 0
        %v226 = vsel %vm215, %v199, 0
        %v229 = vsel %vm215, %v200, 0
        %v232 = vsel %vm215, %v201, 0
        %234 = vmatprep.subr.mxu0 0.0
        %235 = vmatpush1.msra.mxu0 0.0
        %236 = vmatprep.subr.mxu0 0.0
        %237 = vmatpush1.msra.mxu0 0.0
        %238 = vmatprep.subr.mxu0 0.0
        %239 = vmatpush1.msra.mxu0 0.0
        %240 = vmatprep.subr.mxu0 0.0
        %241 = vmatpush1.msra.mxu0 0.0
        %242 = vmatprep.subr.mxu0 0.0
        %243 = vmatpush1.msra.mxu0 0.0
        %244 = vmatprep.subr.mxu0 0.0
        %245 = vmatpush1.msra.mxu0 0.0
        %246 = vmatprep.subr.mxu0 0.0
        %247 = vmatpush1.msra.mxu0 0.0
        %248 = vmatprep.subr.mxu0 0.0
        %249 = vmatpush1.msra.mxu0 0.0
        %250 = vmatprep.subr.mxu0 0.0
        %251 = vmatpush1.msra.mxu0 0.0
        %252 = vmatprep.subr.mxu0 0.0
        %253 = vmatpush1.msra.mxu0 0.0
        %254 = vmatprep.subr.mxu0 0.0
        %255 = vmatpush1.msra.mxu0 %v207
        %256 = vmatprep.subr.mxu0 0.0
        %257 = vmatpush1.msra.mxu0 %v206
        %258 = vmatprep.subr.mxu0 0.0
        %259 = vmatpush1.msra.mxu0 %v205
        %260 = vmatprep.subr.mxu0 0.0
        %261 = vmatpush1.msra.mxu0 %v204
        %262 = vmatprep.subr.mxu0 0.0
        %263 = vmatpush1.msra.mxu0 %v203
        %264 = vmatprep.subr.mxu0 0.0
        %265 = vmatpush1.msra.mxu0 %v202
        %266 = vmatprep.subr.mxu0 0.0
        %267 = vmatpush2.msra.mxu0 0.0
        %268 = vmatprep.subr.mxu0 0.0
        %269 = vmatpush2.msra.mxu0 0.0
        %270 = vmatprep.subr.mxu0 0.0
        %271 = vmatpush2.msra.mxu0 0.0
        %272 = vmatprep.subr.mxu0 0.0
        %273 = vmatpush2.msra.mxu0 0.0
        %274 = vmatprep.subr.mxu0 0.0
        %275 = vmatpush2.msra.mxu0 0.0
        %276 = vmatprep.subr.mxu0 0.0
        %277 = vmatpush2.msra.mxu0 0.0
        %278 = vmatprep.subr.mxu0 0.0
        %279 = vmatpush2.msra.mxu0 0.0
        %280 = vmatprep.subr.mxu0 0.0
        %281 = vmatpush2.msra.mxu0 0.0
        %282 = vmatprep.subr.mxu0 0.0
        %283 = vmatpush2.msra.mxu0 0.0
        %284 = vmatprep.subr.mxu0 0.0
        %285 = vmatpush2.msra.mxu0 0.0
        %286 = vmatprep.subr.mxu0 0.0
        %287 = vmatpush2.msra.mxu0 0.0
        %288 = vmatprep.subr.mxu0 0.0
        %289 = vmatpush2.msra.mxu0 0.0
        %290 = vmatprep.subr.mxu0 0.0
        %291 = vmatpush2.msra.mxu0 0.0
        %292 = vmatprep.subr.mxu0 0.0
        %293 = vmatpush2.msra.mxu0 0.0
        %294 = vmatprep.subr.mxu0 0.0
        %295 = vmatpush2.msra.mxu0 0.0
        %296 = vmatprep.subr.mxu0 0.0
        %297 = vmatpush2.msra.mxu0 0.0
        %298 = vmatprep.mubr.f32.mxu0 0.0
        %299 = vmatmul.mubr.f32.gmra.mxu0 %v217
        %v300 = vpop.f32.mrf.mxu0
        %v301 = vadd.f32 %v213, %v300
        %v302 = vpop.f32.mrf.mxu0
        %303 = vmatprep.mubr.f32.mxu0 0.0
        %304 = vmatmul.mubr.f32.gmra.mxu0 %v220
        %v305 = vpop.f32.mrf.mxu0
        %v306 = vadd.f32 %v213, %v305
        %v307 = vpop.f32.mrf.mxu0
        %308 = vmatprep.mubr.f32.mxu0 0.0
        %309 = vmatmul.mubr.f32.gmra.mxu0 %v223
        %v310 = vpop.f32.mrf.mxu0
        %v311 = vadd.f32 %v213, %v310
        %v312 = vpop.f32.mrf.mxu0
        %313 = vmatprep.mubr.f32.mxu0 0.0
        %314 = vmatmul.mubr.f32.gmra.mxu0 %v226
        %v315 = vpop.f32.mrf.mxu0
        %v316 = vadd.f32 %v213, %v315
        %v317 = vpop.f32.mrf.mxu0
        %318 = vmatprep.mubr.f32.mxu0 0.0
        %319 = vmatmul.mubr.f32.gmra.mxu0 %v229
        %v320 = vpop.f32.mrf.mxu0
        %v321 = vadd.f32 %v213, %v320
        %v322 = vpop.f32.mrf.mxu0
        %323 = vmatprep.mubr.f32.mxu0 0.0
        %324 = vmatmul.mubr.f32.gmra.mxu0 %v232
        %v325 = vpop.f32.mrf.mxu0
        %v326 = vadd.f32 %v213, %v325
        %v327 = vpop.f32.mrf.mxu0
        %328 = vdwg.mxu0
        %329 = vst [vmem:[%s176] sm:$0xff] %v301
        %330 = vst [vmem:[%s176 + $0x8] sm:$0xff] %v306
        %331 = vst [vmem:[%s176 + $0x10] sm:$0xff] %v311
        %332 = vst [vmem:[%s176 + $0x18] sm:$0xff] %v316
        %333 = vst [vmem:[%s176 + $0x20] sm:$0xff] %v321
        %334 = vst [vmem:[%s176 + $0x28] sm:$0xff] %v326
        %s335 = sand.u32 %s93, 1
        %s336 = scalar_lea.sflag [#allocation3], %s335
        %s337 = sand.u32 %s93, 1
        %s338 = smul.addr %s337, 48
        %s339 = scalar_lea.vmem [#allocation2], %s338
        // Predicated region
        $region33: #{tpu_custom_call.1} parent=31 // pred_check
          %p340 = pneg %p103
        $region34: #{tpu_custom_call.1} parent=31 // pred_check_branch
          %342 = sbr.rel (%p340) target = $region36
        $region35: #{tpu_custom_call.1} parent=31 // pred_region
          %s343 = smul.u32 6, %s17
          %s344 = ssub.s32 16, %s343
          %p345 = scmp.lt.s32.totalorder %s344, 6
          %s346 = scalar_select %p345, %s344, 6
          %s347 = smul.u32 128, %s346
          %s349 = ssub.s32 768, %s347
          %350 = vsyncadd %s336, %s349
          %p351 = scmp.ne.s32.totalorder 0, %s347
          %s352 = smul.addr %s343, 128
          %s353 = scalar_lea.hbm %s3, %s352
          %s354 = smul.u32 8, %s346
          %s355 = sshll.u32 %s339, 4
          %s356 = int_to_ptr.vmem [resolvable:$true] %s355
          %s357 = sshll.u32 %s354, 4
          %361 = dma.vmem_to_hbm [thread:$0]  (%p351), %s356, %s357, %s353, %s336, 128, 128, 8
        $region36: #{tpu_custom_call.1} parent=31 // pred_fallthru
          _
      $region32: #{tpu_custom_call.1} parent=5 // pred_fallthru
        _
      %p362 = scmp.le.s32.totalorder 2, %s12
      // Predicated region
      $region37: #{tpu_custom_call.1} parent=5 // pred_check
        %p363 = pneg %p362
      $region38: #{tpu_custom_call.1} parent=5 // pred_check_branch
        %365 = sbr.rel (%p363) target = $region40
      $region39: #{tpu_custom_call.1} parent=5 // pred_region
        %s366 = ssub.s32 %s12, 2
        // Predicated region
        $region41: #{tpu_custom_call.1} parent=39 // pred_check
          %p367 = pneg %p109
        $region42: #{tpu_custom_call.1} parent=39 // pred_check_branch
          %369 = sbr.rel (%p367) target = $region44
        $region43: #{tpu_custom_call.1} parent=39 // pred_region
          %s370 = sand.u32 %s94, 1
          %s371 = scalar_lea.sflag [#allocation3], %s370
          %s372 = sand.u32 %s94, 1
          %s373 = smul.addr %s372, 48
          %s374 = scalar_lea.vmem [#allocation2], %s373
          %375 = dma.done %s371, 768
        $region44: #{tpu_custom_call.1} parent=39 // pred_fallthru
          _
      $region40: #{tpu_custom_call.1} parent=5 // pred_fallthru
        _
    $region6: #{tpu_custom_call.1} parent=1 // loop_footer
      %s16 = sadd.s32 1, %s12
    $region7: #{tpu_custom_call.1} parent=1 // loop_footer_branch
      %11 = sbr.rel target = $region3
    $region8: #{tpu_custom_call.1} parent=1 // loop_exit
      _
    %376 = vsyncpa [#allocation3], 1
    %s377 = scalar_lea.sflag [#allocation3], 1
    %378 = vsyncpa %s377, 1

</llo_original>
